<compile_context>
chip_gen: v7x
topology: tpu7x:2x2x1
jax: 0.10.0
libtpu: 0.0.40
codegen_flags: <defaults>
</compile_context>

<pallas_src>
import jax
import jax.numpy as jnp
from jax.experimental import pallas as pl
from jax.experimental.pallas import tpu as pltpu


def _cdiv(a, b):
    return (a + b - 1) // b


def _round_up(a, m):
    return _cdiv(a, m) * m


def ebm_kernel(x_ref, w_ref, b_ref, vr_ref, vi_ref, out_ref):
    """One batch tile of the fused EBM forward.

    x_ref  : (TB, F)    bf16 one-hot tile (batch on sublanes, features on lanes)
    w_ref  : (F, HA)    bf16 fused weights  [W1 | lp_hi | lp_lo | 0 | pad]
    b_ref  : (1, HA)    f32  fused bias     [b1 | 0 | 0 | b2 | pad]
    vr_ref : (1, HA)    f32  relu-path sel  [w2 | 0 | 0 | 0  | pad]
    vi_ref : (1, HA)    f32  id-path sel    [0..| 1 | 1 | 1  | pad]
    out_ref: (1, 1, TB) f32  lane-dense row of logp + bd for this tile
    """
    # Single-pass bf16 x bf16 MXU matmul, f32 accumulation.
    y = jnp.dot(x_ref[...], w_ref[...], preferred_element_type=jnp.float32)
    y = y + b_ref[...]
    # relu only on the hidden columns (selected by vr); the bd / bias columns
    # take the identity path.  Padding columns are zero on every operand.
    fused = jnp.maximum(y, 0.0) * vr_ref[...] + y * vi_ref[...]
    col = jnp.sum(fused, axis=-1, keepdims=True)          # (TB, 1)
    # Lane-dense store: relayout the per-row sums into a contiguous (1, TB)
    # row so the output writeback is one unmasked store, not a strided
    # masked column write into a lane-padded buffer.
    out_ref[...] = col.reshape(out_ref.shape)


def ebm_forward(x, mean, w1, b1, w2, b2, *, tb=4096,
                vmem_budget=24 * 1024 * 1024,
                vmem_limit_bytes=48 * 1024 * 1024):
    """x: (B, D, S) one-hot float; mean: (D, S) positive probs. Returns (B,)."""
    B, D, S = x.shape
    F = D * S
    H = w1.shape[1]
    # Columns: [W1 (H) | lp_hi | lp_lo | b2-carrier], zero-padded to 128 lanes.
    HA = _round_up(H + 3, 128)
    pad_cols = HA - (H + 3)
    f32 = jnp.float32

    # ---- parameter prep (tiny, plain JAX) ---------------------------------
    # OneHotCategorical(probs=mean) normalizes, so log_softmax(log(mean)) is
    # the normalized log-prob table.
    lp = jax.nn.log_softmax(jnp.log(mean), axis=-1)        # (D, S)
    lp_col = lp.reshape(F, 1).astype(f32)
    lp_hi = lp_col.astype(jnp.bfloat16).astype(f32)        # bf16-exact high part
    lp_lo = lp_col - lp_hi                                  # residual -> 2nd bf16 column

    w_full = jnp.concatenate(
        [w1.astype(f32), lp_hi, lp_lo, jnp.zeros((F, 1 + pad_cols), f32)],
        axis=1).astype(jnp.bfloat16)                        # (F, HA) bf16

    b_full = jnp.concatenate(
        [b1.reshape(1, H).astype(f32), jnp.zeros((1, 2), f32),
         b2.reshape(1, 1).astype(f32), jnp.zeros((1, pad_cols), f32)], axis=1)
    v_relu = jnp.concatenate(
        [w2.reshape(1, H).astype(f32), jnp.zeros((1, 3 + pad_cols), f32)], axis=1)
    v_id = jnp.concatenate(
        [jnp.zeros((1, H), f32), jnp.ones((1, 3), f32),
         jnp.zeros((1, pad_cols), f32)], axis=1)

    # ---- batch tiling ------------------------------------------------------
    # VMEM per batch row: double-buffered bf16 x tile + f32 intermediates
    # (y, fused) + double-buffered lane-dense f32 output element.
    bytes_per_row = 2 * F * 2 + 2 * HA * 4 + 2 * 4
    tb_cap = max(8, (vmem_budget // bytes_per_row) // 8 * 8)
    tb_cap = min(tb_cap, _round_up(tb, 8))

    B8 = _round_up(B, 8)
    min_tiles = 2 if B8 >= 16 else 1        # keep both v7x TensorCores busy
    n_tiles = max(_cdiv(B8, tb_cap), min_tiles)
    if n_tiles > 1 and n_tiles % 2:
        n_tiles += 1                        # even tile count splits across 2 TCs
    TB = _round_up(_cdiv(B8, n_tiles), 8)
    B_pad = n_tiles * TB

    # One-hot 0/1 is exact in bf16: halves HBM traffic on the dominant stream.
    x_flat = x.reshape(B, F).astype(jnp.bfloat16)
    if B_pad != B:
        x_flat = jnp.pad(x_flat, ((0, B_pad - B), (0, 0)))

    out = pl.pallas_call(
        ebm_kernel,
        out_shape=jax.ShapeDtypeStruct((n_tiles, 1, TB), jnp.float32),
        grid_spec=pltpu.PrefetchScalarGridSpec(
            num_scalar_prefetch=0,
            grid=(n_tiles,),
            in_specs=[
                # x tile: the only per-step stream (auto double-buffered).
                # TODO(synk): pipeline_mode=pl.Buffered(3) here if profiling
                # still shows exposed DMA after the tile-size bump.
                pl.BlockSpec((TB, F), lambda i: (i, 0)),
                pl.BlockSpec((F, HA), lambda i: (0, 0)),   # weights: VMEM-resident
                pl.BlockSpec((1, HA), lambda i: (0, 0)),   # fused bias
                pl.BlockSpec((1, HA), lambda i: (0, 0)),   # relu selector
                pl.BlockSpec((1, HA), lambda i: (0, 0)),   # identity selector
            ],
            out_specs=pl.BlockSpec((1, 1, TB), lambda i: (i, 0, 0)),
        ),
        compiler_params=pltpu.CompilerParams(
            # Independent batch tiles -> shard across v7x's two TensorCores.
            dimension_semantics=("parallel",),
            # Explicit scoped-VMEM limit: above the v5e 16 MiB default so the
            # large roofline-friendly tiles fit, below v7x's 64 MiB physical.
            vmem_limit_bytes=vmem_limit_bytes,
        ),
    )(x_flat, w_full, b_full, v_relu, v_id)

    return out.reshape(B_pad)[:B]           # squeeze -> (B,)


def ebm_reference(x, mean, w1, b1, w2, b2):
    """Pure-JAX reference mirroring the PyTorch module."""
    B, D, S = x.shape
    lp = jax.nn.log_softmax(jnp.log(mean), axis=-1)
    bd = (x * lp[None]).sum(-1).sum(-1)
    xf = x.reshape(B, D * S)
    h = jnp.maximum(xf @ w1 + b1, 0.0)
    logp = (h @ w2 + b2).squeeze()
    return logp + bd


if __name__ == "__main__":
    key = jax.random.PRNGKey(0)
    B, D, S, H = 8, 16, 8, 32
    F = D * S

    k_mean, k_cat, k_w1, k_b1, k_w2, k_b2 = jax.random.split(key, 6)

    # Base-distribution mean: positive probs over S categories per dim
    # (strictly positive -> no -inf log-probs).
    mean = jax.random.uniform(k_mean, (D, S), minval=0.1, maxval=1.0,
                              dtype=jnp.float32)

    # One-hot categorical input x: (B, D, S).
    cats = jax.random.categorical(k_cat, jnp.log(mean)[None].repeat(B, axis=0))
    x = jax.nn.one_hot(cats, S, dtype=jnp.float32)

    # Deterministic synthetic net parameters.
    w1 = jax.random.normal(k_w1, (F, H), dtype=jnp.float32) * 0.05
    b1 = jax.random.normal(k_b1, (H,), dtype=jnp.float32) * 0.01
    w2 = jax.random.normal(k_w2, (H, 1), dtype=jnp.float32) * 0.05
    b2 = jax.random.normal(k_b2, (1,), dtype=jnp.float32) * 0.01

    out = ebm_forward(x, mean, w1, b1, w2, b2)
    out = jax.block_until_ready(out)

    ref = ebm_reference(x, mean, w1, b1, w2, b2)
    assert out.shape == (B,), out.shape
    assert jnp.allclose(out, ref, atol=2e-3, rtol=2e-3), (out, ref)

    print("KERNEL_OK")
</pallas_src>

<mosaic_0001>
module attributes {stable_mosaic.version = 11 : i64} {
  func.func @ebm_kernel(%arg0: i32, %arg1: memref<8x128xbf16, #tpu.memory_space<vmem>>, %arg2: memref<128x128xbf16, #tpu.memory_space<vmem>>, %arg3: memref<1x128xf32, #tpu.memory_space<vmem>>, %arg4: memref<1x128xf32, #tpu.memory_space<vmem>>, %arg5: memref<1x128xf32, #tpu.memory_space<vmem>>, %arg6: memref<1x1x8xf32, #tpu.memory_space<vmem>>) attributes {dimension_semantics = [#tpu.dimension_semantics<parallel>], iteration_bounds = array<i64: 1>, scalar_prefetch = 0 : i64, scratch_operands = 0 : i64, tpu.core_type = #tpu.core_type<tc>, window_params = [{transform_indices = @transform_0, window_bounds = array<i64: 8, 128>}, {pipeline_mode = #tpu.pipeline_mode<synchronous>, transform_indices = @transform_1, window_bounds = array<i64: 128, 128>}, {pipeline_mode = #tpu.pipeline_mode<synchronous>, transform_indices = @transform_2, window_bounds = array<i64: 1, 128>}, {pipeline_mode = #tpu.pipeline_mode<synchronous>, transform_indices = @transform_3, window_bounds = array<i64: 1, 128>}, {pipeline_mode = #tpu.pipeline_mode<synchronous>, transform_indices = @transform_4, window_bounds = array<i64: 1, 128>}, {transform_indices = @transform_5, window_bounds = array<i64: 1, 1, 8>}]} {
    %c0 = arith.constant 0 : index
    %c0_0 = arith.constant 0 : index
    %0 = vector.load %arg1[%c0, %c0_0] : memref<8x128xbf16, #tpu.memory_space<vmem>>, vector<8x128xbf16>
    %c0_1 = arith.constant 0 : index
    %c0_2 = arith.constant 0 : index
    %1 = vector.load %arg2[%c0_1, %c0_2] : memref<128x128xbf16, #tpu.memory_space<vmem>>, vector<128x128xbf16>
    %cst = arith.constant dense<0.000000e+00> : vector<8x128xf32>
    %2 = tpu.matmul %0, %1, %cst {dimension_numbers = #tpu.dot_dimension_numbers<[1], [0], [0], [1], [0, 0, 1, 1], [], []>} : vector<8x128xbf16>, vector<128x128xbf16>, vector<8x128xf32> -> vector<8x128xf32>
    %c0_3 = arith.constant 0 : index
    %c0_4 = arith.constant 0 : index
    %3 = vector.load %arg3[%c0_3, %c0_4] : memref<1x128xf32, #tpu.memory_space<vmem>>, vector<1x128xf32>
    %4 = vector.broadcast %3 : vector<1x128xf32> to vector<8x128xf32>
    %5 = arith.addf %2, %4 : vector<8x128xf32>
    %cst_5 = arith.constant 0.000000e+00 : f32
    %6 = vector.broadcast %cst_5 : f32 to vector<8x128xf32>
    %7 = arith.maximumf %5, %6 : vector<8x128xf32>
    %c0_6 = arith.constant 0 : index
    %c0_7 = arith.constant 0 : index
    %8 = vector.load %arg4[%c0_6, %c0_7] : memref<1x128xf32, #tpu.memory_space<vmem>>, vector<1x128xf32>
    %9 = vector.broadcast %8 : vector<1x128xf32> to vector<8x128xf32>
    %10 = arith.mulf %7, %9 : vector<8x128xf32>
    %c0_8 = arith.constant 0 : index
    %c0_9 = arith.constant 0 : index
    %11 = vector.load %arg5[%c0_8, %c0_9] : memref<1x128xf32, #tpu.memory_space<vmem>>, vector<1x128xf32>
    %12 = vector.broadcast %11 : vector<1x128xf32> to vector<8x128xf32>
    %13 = arith.mulf %5, %12 : vector<8x128xf32>
    %14 = arith.addf %10, %13 : vector<8x128xf32>
    %cst_10 = arith.constant dense<0.000000e+00> : vector<8xf32>
    %15 = vector.multi_reduction <add>, %14, %cst_10 [1] : vector<8x128xf32> to vector<8xf32>
    %16 = vector.shape_cast %15 : vector<8xf32> to vector<8x1xf32>
    %17 = vector.shape_cast %16 : vector<8x1xf32> to vector<1x1x8xf32>
    %c0_11 = arith.constant 0 : index
    %c0_12 = arith.constant 0 : index
    %c0_13 = arith.constant 0 : index
    %18 = vector.load %arg6[%c0_11, %c0_12, %c0_13] : memref<1x1x8xf32, #tpu.memory_space<vmem>>, vector<1x1x8xf32>
    tpu.vector_store %arg6[%c0_11, %c0_12, %c0_13], %17 {strides = array<i32>} : memref<1x1x8xf32, #tpu.memory_space<vmem>>, vector<1x1x8xf32>,
    return
  }
  func.func @transform_0(%arg0: i32) -> (i32, i32) {
    %c0_i32 = arith.constant 0 : i32
    %c0_i32_0 = arith.constant 0 : i32
    return %arg0, %c0_i32 : i32, i32
  }
  func.func @transform_1(%arg0: i32) -> (i32, i32) {
    %c0_i32 = arith.constant 0 : i32
    %c0_i32_0 = arith.constant 0 : i32
    %c0_i32_1 = arith.constant 0 : i32
    return %c0_i32, %c0_i32_0 : i32, i32
  }
  func.func @transform_2(%arg0: i32) -> (i32, i32) {
    %c0_i32 = arith.constant 0 : i32
    %c0_i32_0 = arith.constant 0 : i32
    %c0_i32_1 = arith.constant 0 : i32
    return %c0_i32, %c0_i32_0 : i32, i32
  }
  func.func @transform_3(%arg0: i32) -> (i32, i32) {
    %c0_i32 = arith.constant 0 : i32
    %c0_i32_0 = arith.constant 0 : i32
    %c0_i32_1 = arith.constant 0 : i32
    return %c0_i32, %c0_i32_0 : i32, i32
  }
  func.func @transform_4(%arg0: i32) -> (i32, i32) {
    %c0_i32 = arith.constant 0 : i32
    %c0_i32_0 = arith.constant 0 : i32
    %c0_i32_1 = arith.constant 0 : i32
    return %c0_i32, %c0_i32_0 : i32, i32
  }
  func.func @transform_5(%arg0: i32) -> (i32, i32, i32) {
    %c0_i32 = arith.constant 0 : i32
    %c0_i32_0 = arith.constant 0 : i32
    %c0_i32_1 = arith.constant 0 : i32
    return %arg0, %c0_i32, %c0_i32_0 : i32, i32, i32
  }
}

</mosaic_0001>

<llo_original>
// kernel: tpu_custom_call.1
$region0: #{tpu_custom_call.1}
  #allocation0 [shape = 'u32[]', space=smem, size = 0x4, offset = 0x4, fixed_abs, tag = 'smem constant byte address 0x4 - core index']
  #allocation1 [shape = 'u32[144,128]{1,0:T(1,128)}', space=vmem, size = 0x12000, scoped, tag = 'internal scratch']
  %s0 = inlined_call_operand.hbm [shape: bf16[8,128], index: 0, kind: input, shape index: {}]
  %s1 = inlined_call_operand.hbm [shape: bf16[128,128], index: 1, kind: input, shape index: {}]
  %s2 = inlined_call_operand.vmem [shape: f32[1,128], index: 2, kind: input, shape index: {}]
  %s3 = inlined_call_operand.vmem [shape: f32[1,128], index: 3, kind: input, shape index: {}]
  %s4 = inlined_call_operand.vmem [shape: f32[1,128], index: 4, kind: input, shape index: {}]
  %s5 = inlined_call_operand.hbm [shape: f32[1,1,8], index: 5, kind: output, shape index: {}]
  %s6 = sld [smem:[#allocation0]]
  $region38: #{tpu_custom_call.1} parent=0
    _
  %s8 = ssub.s32 1, %s6
  %s9 = scalar_select 0, %s8, %s6
  $region1: #{tpu_custom_call.1} parent=0
    #allocation2 [shape = 'u8[2048]{0}', space=vmem, size = 0x800, scoped, tag = 'input window, operand 0, single buffered']
    #allocation3 [shape = 's32[1]{0}', space=sflag, size = 0x4, scoped, tag = 'scoped memory for tpu_custom_call.1']
    #allocation4 [shape = 's32[1]{0}', space=sflag, size = 0x4, scoped, tag = 'scoped memory for tpu_custom_call.1']
    #allocation5 [shape = 'u8[32768]{0}', space=vmem, size = 0x8000, scoped, tag = 'input window, operand 1, single buffered']
    #allocation6 [shape = 's32[1]{0}', space=sflag, size = 0x4, scoped, tag = 'scoped memory for tpu_custom_call.1']
    #allocation7 [shape = 'u8[512]{0}', space=vmem, size = 0x400, scoped, tag = 'output window, operand 0, single buffered']
    %10 = vsyncpa [#allocation3], 0
    %11 = vsyncpa [#allocation6], 0
    %12 = vsyncpa [#allocation4], 0
    // Predicated region
    $region2: #{tpu_custom_call.1} parent=1 // pred_check
      _
    $region3: #{tpu_custom_call.1} parent=1 // pred_check_branch
      %14 = sbr.rel (0) target = $region5
    $region4: #{tpu_custom_call.1} parent=1 // pred_region
      %s16 = ssub.s32 64, 64
      %17 = vsyncadd [#allocation3], %s16
      %s19 = sshll.u32 [#allocation2], 4
      %s20 = int_to_ptr.vmem [resolvable:$true] %s19
      %22 = dma.hbm_to_vmem [thread:$0]  %s0, 64, %s20, [#allocation3]
    $region5: #{tpu_custom_call.1} parent=1 // pred_fallthru
      _
    // Predicated region
    $region6: #{tpu_custom_call.1} parent=1 // pred_check
      _
    $region7: #{tpu_custom_call.1} parent=1 // pred_check_branch
      %24 = sbr.rel (0) target = $region9
    $region8: #{tpu_custom_call.1} parent=1 // pred_region
      %s26 = ssub.s32 1024, 1024
      %27 = vsyncadd [#allocation6], %s26
      %s28 = sshll.u32 [#allocation5], 4
      %s29 = int_to_ptr.vmem [resolvable:$true] %s28
      %34 = dma.hbm_to_vmem [thread:$0]  %s1, 1024, %s29, [#allocation6], 64, 64, 4
    $region9: #{tpu_custom_call.1} parent=1 // pred_fallthru
      _
    // Predicated region
    $region10: #{tpu_custom_call.1} parent=1 // pred_check
      _
    $region11: #{tpu_custom_call.1} parent=1 // pred_check_branch
      %36 = sbr.rel (0) target = $region13
    $region12: #{tpu_custom_call.1} parent=1 // pred_region
      _
    $region13: #{tpu_custom_call.1} parent=1 // pred_fallthru
      _
    // Predicated region
    $region14: #{tpu_custom_call.1} parent=1 // pred_check
      _
    $region15: #{tpu_custom_call.1} parent=1 // pred_check_branch
      %38 = sbr.rel (0) target = $region17
    $region16: #{tpu_custom_call.1} parent=1 // pred_region
      _
    $region17: #{tpu_custom_call.1} parent=1 // pred_fallthru
      _
    // Predicated region
    $region18: #{tpu_custom_call.1} parent=1 // pred_check
      _
    $region19: #{tpu_custom_call.1} parent=1 // pred_check_branch
      %40 = sbr.rel (0) target = $region21
    $region20: #{tpu_custom_call.1} parent=1 // pred_region
      _
    $region21: #{tpu_custom_call.1} parent=1 // pred_fallthru
      _
    // Predicated region
    $region22: #{tpu_custom_call.1} parent=1 // pred_check
      _
    $region23: #{tpu_custom_call.1} parent=1 // pred_check_branch
      %42 = sbr.rel (0) target = $region25
    $region24: #{tpu_custom_call.1} parent=1 // pred_region
      %43 = dma.done [#allocation3], 64
    $region25: #{tpu_custom_call.1} parent=1 // pred_fallthru
      _
    // Predicated region
    $region26: #{tpu_custom_call.1} parent=1 // pred_check
      _
    $region27: #{tpu_custom_call.1} parent=1 // pred_check_branch
      %45 = sbr.rel (0) target = $region29
    $region28: #{tpu_custom_call.1} parent=1 // pred_region
      %46 = dma.done [#allocation6], 1024
    $region29: #{tpu_custom_call.1} parent=1 // pred_fallthru
      _
    %v48 = vld [vmem:[#allocation2] sm:$0xf]
    %v49 = vld [vmem:[#allocation5] sm:$0xf]
    %v50 = vld [vmem:[#allocation5 + $0x4] sm:$0xf]
    %v51 = vld [vmem:[#allocation5 + $0x8] sm:$0xf]
    %v52 = vld [vmem:[#allocation5 + $0xc] sm:$0xf]
    %v53 = vld [vmem:[#allocation5 + $0x10] sm:$0xf]
    %v54 = vld [vmem:[#allocation5 + $0x14] sm:$0xf]
    %v55 = vld [vmem:[#allocation5 + $0x18] sm:$0xf]
    %v56 = vld [vmem:[#allocation5 + $0x1c] sm:$0xf]
    %v57 = vld [vmem:[#allocation5 + $0x20] sm:$0xf]
    %v58 = vld [vmem:[#allocation5 + $0x24] sm:$0xf]
    %v59 = vld [vmem:[#allocation5 + $0x28] sm:$0xf]
    %v60 = vld [vmem:[#allocation5 + $0x2c] sm:$0xf]
    %v61 = vld [vmem:[#allocation5 + $0x30] sm:$0xf]
    %v62 = vld [vmem:[#allocation5 + $0x34] sm:$0xf]
    %v63 = vld [vmem:[#allocation5 + $0x38] sm:$0xf]
    %v64 = vld [vmem:[#allocation5 + $0x3c] sm:$0xf]
    %v65 = vld [vmem:[%s2] sm:$0x1]
    %v67 = vlaneseq
    %v68 = vshrl.u32 %v67, 7
    %v69 = vsub.s32 0, %v68
    %v70 = vrot.slane %v65, %v69
    %v88 = vunpack.c.l.b16 %v49
    %v89 = vunpack.c.l.b16 %v50
    %v90 = vunpack.c.l.b16 %v51
    %v91 = vunpack.c.l.b16 %v52
    %v92 = vunpack.c.l.b16 %v53
    %v93 = vunpack.c.l.b16 %v54
    %v94 = vunpack.c.l.b16 %v55
    %v95 = vunpack.c.l.b16 %v56
    %v96 = vunpack.c.l.b16 %v57
    %v97 = vunpack.c.l.b16 %v58
    %v98 = vunpack.c.l.b16 %v59
    %v99 = vunpack.c.l.b16 %v60
    %v100 = vunpack.c.l.b16 %v61
    %v101 = vunpack.c.l.b16 %v62
    %v102 = vunpack.c.l.b16 %v63
    %v103 = vunpack.c.l.b16 %v64
    %v104 = vpack.c.b16 %v89, %v88
    %v105 = vpack.c.b16 %v91, %v90
    %v106 = vpack.c.b16 %v93, %v92
    %v107 = vpack.c.b16 %v95, %v94
    %v108 = vpack.c.b16 %v97, %v96
    %v109 = vpack.c.b16 %v99, %v98
    %v110 = vpack.c.b16 %v101, %v100
    %v111 = vpack.c.b16 %v103, %v102
    %120 = vmatprep.subr.bf16.mxu0 0
    %121 = vmatpush1.bf16.msra.mxu0 %v104
    %122 = vmatprep.subr.bf16.mxu0 0
    %123 = vmatpush1.bf16.msra.mxu0 %v105
    %124 = vmatprep.subr.bf16.mxu0 0
    %125 = vmatpush1.bf16.msra.mxu0 %v106
    %126 = vmatprep.subr.bf16.mxu0 0
    %127 = vmatpush1.bf16.msra.mxu0 %v107
    %128 = vmatprep.subr.bf16.mxu0 0
    %129 = vmatpush1.bf16.msra.mxu0 %v108
    %130 = vmatprep.subr.bf16.mxu0 0
    %131 = vmatpush1.bf16.msra.mxu0 %v109
    %132 = vmatprep.subr.bf16.mxu0 0
    %133 = vmatpush1.bf16.msra.mxu0 %v110
    %134 = vmatprep.subr.bf16.mxu0 0
    %135 = vmatpush1.bf16.msra.mxu0 %v111
    %136 = vmatprep.subr.bf16.mxu0 0
    %137 = vmatpush1.bf16.msra.mxu0 0
    %138 = vmatprep.subr.bf16.mxu0 0
    %139 = vmatpush1.bf16.msra.mxu0 0
    %140 = vmatprep.subr.bf16.mxu0 0
    %141 = vmatpush1.bf16.msra.mxu0 0
    %142 = vmatprep.subr.bf16.mxu0 0
    %143 = vmatpush1.bf16.msra.mxu0 0
    %144 = vmatprep.subr.bf16.mxu0 0
    %145 = vmatpush1.bf16.msra.mxu0 0
    %146 = vmatprep.subr.bf16.mxu0 0
    %147 = vmatpush1.bf16.msra.mxu0 0
    %148 = vmatprep.subr.bf16.mxu0 0
    %149 = vmatpush1.bf16.msra.mxu0 0
    %150 = vmatprep.subr.bf16.mxu0 0
    %151 = vmatpush1.bf16.msra.mxu0 0
    %152 = vmatprep.mubr.bf16.mxu0 0
    %153 = vmatmul.mubr.bf16.gmra.mrb[0].mxu0 %v48
    %v154 = vpop.f32.mrb[0].mxu0
    %v155 = vadd.f32 %v70, %v154
    %v156 = vpop.f32.mrb[0].mxu0
    %v157 = vpop.f32.mrb[0].mxu0
    %v158 = vpop.f32.mrb[0].mxu0
    %159 = vdwg.mxu0
    %v160 = vmax.f32 %v155, 0.0
    %v161 = vld [vmem:[%s3] sm:$0x1]
    %v163 = vlaneseq
    %v164 = vshrl.u32 %v163, 7
    %v165 = vsub.s32 0, %v164
    %v166 = vrot.slane %v161, %v165
    %v168 = vmul.f32 %v160, %v166
    %v169 = vld [vmem:[%s4] sm:$0x1]
    %v171 = vlaneseq
    %v172 = vshrl.u32 %v171, 7
    %v173 = vsub.s32 0, %v172
    %v174 = vrot.slane %v169, %v173
    %v176 = vmul.f32 %v155, %v174
    %v177 = vadd.f32 %v168, %v176
    %178 = vadd.xlane.f32.xlu0 %v177
    %v179 = vpop.xlane.xlu0 %178
    %v181 = vlaneseq
    %v182 = vand.u32 %v181, 127
    %v183 = vlaneseq
    %v184 = vshrl.u32 %v183, 7
    %v185 = vsub.s32 %v182, %v184
    %v186 = vrot.slane %v179, %v185
    %vm188 = vcmask 57344
    %189 = vst.msk [vmem:[#allocation7] sm:$0x1] %vm188, %v186
    // Predicated region
    $region30: #{tpu_custom_call.1} parent=1 // pred_check
      _
    $region31: #{tpu_custom_call.1} parent=1 // pred_check_branch
      %191 = sbr.rel (0) target = $region33
    $region32: #{tpu_custom_call.1} parent=1 // pred_region
      %s193 = ssub.s32 16, 16
      %194 = vsyncadd [#allocation4], %s193
      %s196 = sshll.u32 [#allocation7], 4
      %s197 = int_to_ptr.vmem [resolvable:$true] %s196
      %199 = dma.vmem_to_hbm [thread:$0]  %s197, 16, %s5, [#allocation4]
    $region33: #{tpu_custom_call.1} parent=1 // pred_fallthru
      _
    // Predicated region
    $region34: #{tpu_custom_call.1} parent=1 // pred_check
      _
    $region35: #{tpu_custom_call.1} parent=1 // pred_check_branch
      %201 = sbr.rel (0) target = $region37
    $region36: #{tpu_custom_call.1} parent=1 // pred_region
      %202 = dma.done [#allocation4], 16
    $region37: #{tpu_custom_call.1} parent=1 // pred_fallthru
      _
    %203 = vsyncpa [#allocation3], 1
    %204 = vsyncpa [#allocation6], 1
    %205 = vsyncpa [#allocation4], 1

</llo_original>
